<compile_context>
chip_gen: v6e
topology: v6e:2x2x1
jax: 0.10.0
libtpu: 0.0.40
codegen_flags: <defaults>
</compile_context>

<pallas_src>
import functools

import jax
import jax.numpy as jnp
from jax import lax
from jax.experimental import pallas as pl
from jax.experimental.pallas import tpu as pltpu

_LANE = 128                      # lane width; 5/2-wide dims are zero-padded to this
_SUB = 512                       # compute sub-tile rows inside a DMA tile
_VMEM_TILE_BUDGET = 18 * 1024 * 1024   # conservative across v5e / v6e / v7x
_VMEM_LIMIT_BYTES = 32 * 1024 * 1024   # explicit scoped-VMEM request
_DENSE_OUT_MIN_D = 512           # lane-dense output slab only when reads dominate


def _round_up(n: int, m: int) -> int:
    return ((n + m - 1) // m) * m


def _pad2d(a, rows, cols):
    return jnp.pad(a, ((0, rows - a.shape[0]), (0, cols - a.shape[1])))


def _mlp_kernel(x_ref, w1_ref, b1_ref, w2_ref, b2_ref, w3_ref, b3_ref, o_ref,
                *, sub, n_sub, out_cols):
    # Weights/biases are VMEM-resident blocks; hoist their loads out of the loop.
    w1 = w1_ref[...]
    b1 = b1_ref[...]
    w2 = w2_ref[...]
    b2 = b2_ref[...]
    w3 = w3_ref[...]
    b3 = b3_ref[...]

    def body(s, carry):
        if isinstance(s, int):
            r0 = s * sub
        else:
            r0 = pl.multiple_of(s * sub, sub)
        x = x_ref[pl.ds(r0, sub), :]
        h1 = jnp.dot(x, w1, preferred_element_type=jnp.float32) + b1
        h1 = jnp.maximum(h1, 0.0).astype(w2.dtype)          # ReLU (VPU)
        h2 = jnp.dot(h1, w2, preferred_element_type=jnp.float32) + b2
        h2 = jnp.maximum(h2, 0.0).astype(w3.dtype)          # ReLU (VPU)
        out = jnp.dot(h2, w3, preferred_element_type=jnp.float32) + b3
        # out_cols == o_ref lane width: either the real out_dim (narrow store)
        # or the full 128-lane padded slab (dense store, sliced in the wrapper).
        o_ref[pl.ds(r0, sub), :] = out[:, :out_cols].astype(o_ref.dtype)
        return carry

    if n_sub == 1:
        body(0, None)
    else:
        lax.fori_loop(0, n_sub, body, None)


def _prep_params(params, d):
    """Validate shapes (explicitly catch raw (out,in) weights / 1-D biases)."""
    w1 = jnp.asarray(params["w1"])
    w2 = jnp.asarray(params["w2"])
    w3 = jnp.asarray(params["w3"])
    b1 = jnp.asarray(params["b1"])
    b2 = jnp.asarray(params["b2"])
    b3 = jnp.asarray(params["b3"])
    if b1.ndim == 1:
        b1 = b1[None, :]
    if b2.ndim == 1:
        b2 = b2[None, :]
    if b3.ndim == 1:
        b3 = b3[None, :]

    if w1.shape[0] != d:
        raise ValueError(
            f"w1 must be stored (in, out) = ({d}, h1); got {w1.shape}. "
            "If you are passing raw nn.Linear weights (out, in), transpose them.")
    h1_dim, h2_dim, out_dim = w1.shape[1], w2.shape[1], w3.shape[1]
    if w2.shape != (h1_dim, h2_dim) or w3.shape[0] != h2_dim:
        raise ValueError(f"inconsistent weight shapes: {w1.shape} {w2.shape} {w3.shape}")
    if b1.shape != (1, h1_dim) or b2.shape != (1, h2_dim) or b3.shape != (1, out_dim):
        raise ValueError(f"bias shapes must be (1, n): {b1.shape} {b2.shape} {b3.shape}")
    if max(h1_dim, h2_dim, out_dim) > _LANE:
        raise ValueError("hidden/output dims must be <= 128 for this kernel")
    return w1, b1, w2, b2, w3, b3, h1_dim, h2_dim, out_dim


def student_model_forward(x, params, *, tile_b=32768, fc23_dtype=jnp.float32):
    """StudentModel forward pass as a batch-tiled Pallas TPU kernel.

    x: (batch, input_dim); dtype f32 (PyTorch-exact) or bf16 if stored bf16 at rest.
    params: w1 (D,5), b1 (1,5), w2 (5,5), b2 (1,5), w3 (5,2), b3 (1,2).
    fc23_dtype: dtype of the two tiny padded 128x128 matmuls' MXU inputs.
        jnp.float32 (default) matches PyTorch to ~1e-5; jnp.bfloat16 cuts f32
        multi-pass MXU work 2-4x in the compute-bound small-d regime at the
        cost of ~1e-2 relative numeric deviation.
    """
    x = jnp.asarray(x)
    batch, d = x.shape
    x_isz = x.dtype.itemsize
    w23_isz = jnp.dtype(fc23_dtype).itemsize

    w1, b1, w2, b2, w3, b3, h1_dim, h2_dim, out_dim = _prep_params(params, d)

    # Lane-dense output only when the extra write bytes stay small vs. reads.
    out_cols_hbm = _LANE if d >= _DENSE_OUT_MIN_D else out_dim

    # ---- batch tile from a real VMEM budget ----------------------------------
    align = 16 if x_isz < 4 else 8          # bf16 packs 16 rows per sublane group
    weight_bytes = 2 * (d * _LANE * x_isz + 2 * _LANE * _LANE * w23_isz + 3 * _LANE * 4)
    inter_bytes = 4 * _SUB * _LANE * 4      # h1/h2/out f32 temporaries (+slack)
    per_row = 2 * d * x_isz + 2 * out_cols_hbm * 4   # double-buffered x + out
    tb_budget = max(align, (_VMEM_TILE_BUDGET - weight_bytes - inter_bytes) // per_row)
    # Keep >= 4 batch tiles so ("parallel",) can shard across v7x's 2 TensorCores.
    tb_parallel = _round_up(pl.cdiv(batch, 4), align)
    tb = max(align, min(int(tile_b), int(tb_budget), tb_parallel))
    if tb >= _SUB:
        tb = (tb // _SUB) * _SUB
        sub = _SUB
    else:
        tb = _round_up(tb, align)
        sub = tb
    n_sub = tb // sub
    grid = (pl.cdiv(batch, tb),)            # ragged last tile handled by Pallas

    # ---- zero-pad the tiny 5/2-wide dims up to the 128-lane width ------------
    # (VMEM-only cost; padded lanes stay exactly zero through both ReLUs.)
    w1p = _pad2d(w1.astype(x.dtype), d, _LANE)
    w2p = _pad2d(w2.astype(fc23_dtype), _LANE, _LANE)
    w3p = _pad2d(w3.astype(fc23_dtype), _LANE, _LANE)
    b1p = _pad2d(b1.astype(jnp.float32), 1, _LANE)
    b2p = _pad2d(b2.astype(jnp.float32), 1, _LANE)
    b3p = _pad2d(b3.astype(jnp.float32), 1, _LANE)

    resident = lambda i: (0, 0)             # same block every step -> stays in VMEM

    cost = pl.CostEstimate(
        flops=2 * batch * (d * h1_dim + h1_dim * h2_dim + h2_dim * out_dim),
        transcendentals=0,
        bytes_accessed=(batch * d * x_isz
                        + w1p.size * x_isz
                        + (w2p.size + w3p.size) * w23_isz
                        + (b1p.size + b2p.size + b3p.size) * 4
                        + batch * out_cols_hbm * 4),
    )

    kernel = functools.partial(_mlp_kernel, sub=sub, n_sub=n_sub, out_cols=out_cols_hbm)

    out_hbm = pl.pallas_call(
        kernel,
        out_shape=jax.ShapeDtypeStruct((batch, out_cols_hbm), jnp.float32),
        grid=grid,
        in_specs=[
            pl.BlockSpec((tb, d), lambda i: (i, 0)),   # x: streamed per batch tile
            pl.BlockSpec((d, _LANE), resident),        # w1 (resident)
            pl.BlockSpec((1, _LANE), resident),        # b1 (resident)
            pl.BlockSpec((_LANE, _LANE), resident),    # w2 (resident)
            pl.BlockSpec((1, _LANE), resident),        # b2 (resident)
            pl.BlockSpec((_LANE, _LANE), resident),    # w3 (resident)
            pl.BlockSpec((1, _LANE), resident),        # b3 (resident)
        ],
        out_specs=pl.BlockSpec((tb, out_cols_hbm), lambda i: (i, 0)),
        compiler_params=pltpu.CompilerParams(
            dimension_semantics=("parallel",),         # shard batch tiles across TCs
            vmem_limit_bytes=_VMEM_LIMIT_BYTES,
        ),
        cost_estimate=cost,
    )(x, w1p, b1p, w2p, b2p, w3p, b3p)

    if out_cols_hbm != out_dim:
        out_hbm = out_hbm[:, :out_dim]      # cheap slice of the lane-dense slab
    return out_hbm
    # TODO(synk): for small d, a 64-rows-per-lane-row packed output block would
    # make the narrow store lane-dense too; kept the simple masked store here.


def init_params(key, input_dim, hidden=5, out=2):
    """Deterministic init mirroring nn.Linear shapes (stored transposed)."""
    k1, k2, k3, k4, k5, k6 = jax.random.split(key, 6)

    def uniform(k, shape, fan_in):
        bound = 1.0 / jnp.sqrt(fan_in)
        return jax.random.uniform(k, shape, jnp.float32, -bound, bound)

    return {
        "w1": uniform(k1, (input_dim, hidden), input_dim),
        "b1": uniform(k2, (1, hidden), input_dim),
        "w2": uniform(k3, (hidden, hidden), hidden),
        "b2": uniform(k4, (1, hidden), hidden),
        "w3": uniform(k5, (hidden, out), hidden),
        "b3": uniform(k6, (1, out), hidden),
    }


def reference_forward(x, params):
    h1 = jnp.maximum(x @ params["w1"] + params["b1"], 0.0)
    h2 = jnp.maximum(h1 @ params["w2"] + params["b2"], 0.0)
    return h2 @ params["w3"] + params["b3"]


if __name__ == "__main__":
    key = jax.random.PRNGKey(0)
    kx, kp = jax.random.split(key)

    # --- small canonical case (matches the module spec) ----------------------
    batch, input_dim = 8, 32
    x = jax.random.normal(kx, (batch, input_dim), jnp.float32)
    params = init_params(kp, input_dim)

    out = jax.block_until_ready(student_model_forward(x, params))
    ref = reference_forward(x, params)
    assert out.shape == (batch, 2)
    assert jnp.allclose(out, ref, atol=1e-5, rtol=1e-5)

    # --- ragged batch: multi-tile grid, no wrapper padding --------------------
    x2 = jax.random.normal(kx, (300, input_dim), jnp.float32)
    out2 = jax.block_until_ready(student_model_forward(x2, params))
    ref2 = reference_forward(x2, params)
    assert out2.shape == (300, 2)
    assert jnp.allclose(out2, ref2, atol=1e-5, rtol=1e-5)

    # --- bf16 fc2/fc3 MXU path (looser tolerance by construction) -------------
    out3 = jax.block_until_ready(
        student_model_forward(x2, params, fc23_dtype=jnp.bfloat16))
    assert jnp.allclose(out3, ref2, atol=5e-2, rtol=5e-2)

    # --- larger input_dim: exercises the lane-dense output slab path ----------
    input_dim_big = 512
    x4 = jax.random.normal(kx, (64, input_dim_big), jnp.float32)
    params_big = init_params(kp, input_dim_big)
    out4 = jax.block_until_ready(student_model_forward(x4, params_big))
    ref4 = reference_forward(x4, params_big)
    assert out4.shape == (64, 2)
    assert jnp.allclose(out4, ref4, atol=1e-5, rtol=1e-5)

    print("KERNEL_OK")
</pallas_src>

<mosaic_0001>
module attributes {stable_mosaic.version = 11 : i64} {
  func.func @_mlp_kernel(%arg0: i32, %arg1: memref<8x32xf32, #tpu.memory_space<vmem>>, %arg2: memref<32x128xf32, #tpu.memory_space<vmem>>, %arg3: memref<1x128xf32, #tpu.memory_space<vmem>>, %arg4: memref<128x128xf32, #tpu.memory_space<vmem>>, %arg5: memref<1x128xf32, #tpu.memory_space<vmem>>, %arg6: memref<128x128xf32, #tpu.memory_space<vmem>>, %arg7: memref<1x128xf32, #tpu.memory_space<vmem>>, %arg8: memref<8x2xf32, #tpu.memory_space<vmem>>) attributes {dimension_semantics = [#tpu.dimension_semantics<parallel>], iteration_bounds = array<i64: 1>, scalar_prefetch = 0 : i64, scratch_operands = 0 : i64, tpu.core_type = #tpu.core_type<tc>, window_params = [{transform_indices = @transform_0, window_bounds = array<i64: 8, 32>}, {pipeline_mode = #tpu.pipeline_mode<synchronous>, transform_indices = @transform_1, window_bounds = array<i64: 32, 128>}, {pipeline_mode = #tpu.pipeline_mode<synchronous>, transform_indices = @transform_2, window_bounds = array<i64: 1, 128>}, {pipeline_mode = #tpu.pipeline_mode<synchronous>, transform_indices = @transform_3, window_bounds = array<i64: 128, 128>}, {pipeline_mode = #tpu.pipeline_mode<synchronous>, transform_indices = @transform_4, window_bounds = array<i64: 1, 128>}, {pipeline_mode = #tpu.pipeline_mode<synchronous>, transform_indices = @transform_5, window_bounds = array<i64: 128, 128>}, {pipeline_mode = #tpu.pipeline_mode<synchronous>, transform_indices = @transform_6, window_bounds = array<i64: 1, 128>}, {transform_indices = @transform_7, window_bounds = array<i64: 8, 2>}]} {
    %c0 = arith.constant 0 : index
    %c0_0 = arith.constant 0 : index
    %0 = vector.load %arg2[%c0, %c0_0] : memref<32x128xf32, #tpu.memory_space<vmem>>, vector<32x128xf32>
    %c0_1 = arith.constant 0 : index
    %c0_2 = arith.constant 0 : index
    %1 = vector.load %arg3[%c0_1, %c0_2] : memref<1x128xf32, #tpu.memory_space<vmem>>, vector<1x128xf32>
    %c0_3 = arith.constant 0 : index
    %c0_4 = arith.constant 0 : index
    %2 = vector.load %arg4[%c0_3, %c0_4] : memref<128x128xf32, #tpu.memory_space<vmem>>, vector<128x128xf32>
    %c0_5 = arith.constant 0 : index
    %c0_6 = arith.constant 0 : index
    %3 = vector.load %arg5[%c0_5, %c0_6] : memref<1x128xf32, #tpu.memory_space<vmem>>, vector<1x128xf32>
    %c0_7 = arith.constant 0 : index
    %c0_8 = arith.constant 0 : index
    %4 = vector.load %arg6[%c0_7, %c0_8] : memref<128x128xf32, #tpu.memory_space<vmem>>, vector<128x128xf32>
    %c0_9 = arith.constant 0 : index
    %c0_10 = arith.constant 0 : index
    %5 = vector.load %arg7[%c0_9, %c0_10] : memref<1x128xf32, #tpu.memory_space<vmem>>, vector<1x128xf32>
    %c0_11 = arith.constant 0 : index
    %c0_12 = arith.constant 0 : index
    %6 = vector.load %arg1[%c0_11, %c0_12] : memref<8x32xf32, #tpu.memory_space<vmem>>, vector<8x32xf32>
    %cst = arith.constant dense<0.000000e+00> : vector<8x128xf32>
    %7 = tpu.matmul %6, %0, %cst {dimension_numbers = #tpu.dot_dimension_numbers<[1], [0], [0], [1], [0, 0, 1, 1], [], []>} : vector<8x32xf32>, vector<32x128xf32>, vector<8x128xf32> -> vector<8x128xf32>
    %8 = vector.broadcast %1 : vector<1x128xf32> to vector<8x128xf32>
    %9 = arith.addf %7, %8 : vector<8x128xf32>
    %cst_13 = arith.constant 0.000000e+00 : f32
    %10 = vector.broadcast %cst_13 : f32 to vector<8x128xf32>
    %11 = arith.maximumf %9, %10 : vector<8x128xf32>
    %cst_14 = arith.constant dense<0.000000e+00> : vector<8x128xf32>
    %12 = tpu.matmul %11, %2, %cst_14 {dimension_numbers = #tpu.dot_dimension_numbers<[1], [0], [0], [1], [0, 0, 1, 1], [], []>} : vector<8x128xf32>, vector<128x128xf32>, vector<8x128xf32> -> vector<8x128xf32>
    %13 = vector.broadcast %3 : vector<1x128xf32> to vector<8x128xf32>
    %14 = arith.addf %12, %13 : vector<8x128xf32>
    %cst_15 = arith.constant 0.000000e+00 : f32
    %15 = vector.broadcast %cst_15 : f32 to vector<8x128xf32>
    %16 = arith.maximumf %14, %15 : vector<8x128xf32>
    %cst_16 = arith.constant dense<0.000000e+00> : vector<8x128xf32>
    %17 = tpu.matmul %16, %4, %cst_16 {dimension_numbers = #tpu.dot_dimension_numbers<[1], [0], [0], [1], [0, 0, 1, 1], [], []>} : vector<8x128xf32>, vector<128x128xf32>, vector<8x128xf32> -> vector<8x128xf32>
    %18 = vector.broadcast %5 : vector<1x128xf32> to vector<8x128xf32>
    %19 = arith.addf %17, %18 : vector<8x128xf32>
    %20 = vector.extract_strided_slice %19 {offsets = [0, 0], sizes = [8, 2], strides = [1, 1]} : vector<8x128xf32> to vector<8x2xf32>
    %c0_17 = arith.constant 0 : index
    %c0_18 = arith.constant 0 : index
    %21 = vector.load %arg8[%c0_17, %c0_18] : memref<8x2xf32, #tpu.memory_space<vmem>>, vector<8x2xf32>
    tpu.vector_store %arg8[%c0_17, %c0_18], %20 {strides = array<i32>} : memref<8x2xf32, #tpu.memory_space<vmem>>, vector<8x2xf32>,
    return
  }
  func.func @transform_0(%arg0: i32) -> (i32, i32) {
    %c0_i32 = arith.constant 0 : i32
    %c0_i32_0 = arith.constant 0 : i32
    return %arg0, %c0_i32 : i32, i32
  }
  func.func @transform_1(%arg0: i32) -> (i32, i32) {
    %c0_i32 = arith.constant 0 : i32
    %c0_i32_0 = arith.constant 0 : i32
    %c0_i32_1 = arith.constant 0 : i32
    return %c0_i32, %c0_i32_0 : i32, i32
  }
  func.func @transform_2(%arg0: i32) -> (i32, i32) {
    %c0_i32 = arith.constant 0 : i32
    %c0_i32_0 = arith.constant 0 : i32
    %c0_i32_1 = arith.constant 0 : i32
    return %c0_i32, %c0_i32_0 : i32, i32
  }
  func.func @transform_3(%arg0: i32) -> (i32, i32) {
    %c0_i32 = arith.constant 0 : i32
    %c0_i32_0 = arith.constant 0 : i32
    %c0_i32_1 = arith.constant 0 : i32
    return %c0_i32, %c0_i32_0 : i32, i32
  }
  func.func @transform_4(%arg0: i32) -> (i32, i32) {
    %c0_i32 = arith.constant 0 : i32
    %c0_i32_0 = arith.constant 0 : i32
    %c0_i32_1 = arith.constant 0 : i32
    return %c0_i32, %c0_i32_0 : i32, i32
  }
  func.func @transform_5(%arg0: i32) -> (i32, i32) {
    %c0_i32 = arith.constant 0 : i32
    %c0_i32_0 = arith.constant 0 : i32
    %c0_i32_1 = arith.constant 0 : i32
    return %c0_i32, %c0_i32_0 : i32, i32
  }
  func.func @transform_6(%arg0: i32) -> (i32, i32) {
    %c0_i32 = arith.constant 0 : i32
    %c0_i32_0 = arith.constant 0 : i32
    %c0_i32_1 = arith.constant 0 : i32
    return %c0_i32, %c0_i32_0 : i32, i32
  }
  func.func @transform_7(%arg0: i32) -> (i32, i32) {
    %c0_i32 = arith.constant 0 : i32
    %c0_i32_0 = arith.constant 0 : i32
    return %arg0, %c0_i32 : i32, i32
  }
}

</mosaic_0001>

<llo_original>
// kernel: tpu_custom_call.1
$region0: #{tpu_custom_call.1}
  #allocation0 [shape = 'u32[]', space=smem, size = 0x4, offset = 0x4, fixed_abs, tag = 'smem constant byte address 0x4 - core index']
  #allocation1 [shape = 'u32[144,128]{1,0:T(1,128)}', space=vmem, size = 0x12000, scoped, tag = 'internal scratch']
  %s0 = inlined_call_operand.hbm [shape: f32[8,32], index: 0, kind: input, shape index: {}]
  %s1 = inlined_call_operand.hbm [shape: f32[32,128], index: 1, kind: input, shape index: {}]
  %s2 = inlined_call_operand.vmem [shape: f32[1,128], index: 2, kind: input, shape index: {}]
  %s3 = inlined_call_operand.hbm [shape: f32[128,128], index: 3, kind: input, shape index: {}]
  %s4 = inlined_call_operand.vmem [shape: f32[1,128], index: 4, kind: input, shape index: {}]
  %s5 = inlined_call_operand.hbm [shape: f32[128,128], index: 5, kind: input, shape index: {}]
  %s6 = inlined_call_operand.vmem [shape: f32[1,128], index: 6, kind: input, shape index: {}]
  %s7 = inlined_call_operand.vmem [shape: f32[8,2], index: 7, kind: output, shape index: {}]
  %s8 = sld [smem:[#allocation0]]
  $region54: #{tpu_custom_call.1} parent=0
    _
  %s10 = ssub.s32 1, %s8
  %s11 = scalar_select 0, %s10, %s8
  $region1: #{tpu_custom_call.1} parent=0
    #allocation2 [shape = 'u8[4096]{0}', space=vmem, size = 0x1000, scoped, tag = 'input window, operand 0, single buffered']
    #allocation3 [shape = 's32[1]{0}', space=sflag, size = 0x4, scoped, tag = 'scoped memory for tpu_custom_call.1']
    #allocation4 [shape = 'u8[16384]{0}', space=vmem, size = 0x4000, scoped, tag = 'input window, operand 1, single buffered']
    #allocation5 [shape = 's32[1]{0}', space=sflag, size = 0x4, scoped, tag = 'scoped memory for tpu_custom_call.1']
    #allocation6 [shape = 'u8[65536]{0}', space=vmem, size = 0x10000, scoped, tag = 'input window, operand 3, single buffered']
    #allocation7 [shape = 'u8[65536]{0}', space=vmem, size = 0x10000, scoped, tag = 'input window, operand 5, single buffered']
    #allocation8 [shape = 's32[1]{0}', space=sflag, size = 0x4, scoped, tag = 'scoped memory for tpu_custom_call.1']
    %12 = vsyncpa [#allocation3], 0
    %13 = vsyncpa [#allocation5], 0
    %14 = vsyncpa [#allocation8], 0
    // Predicated region
    $region2: #{tpu_custom_call.1} parent=1 // pred_check
      _
    $region3: #{tpu_custom_call.1} parent=1 // pred_check_branch
      %16 = sbr.rel (0) target = $region5
    $region4: #{tpu_custom_call.1} parent=1 // pred_region
      %s18 = ssub.s32 128, 128
      %19 = vsyncadd [#allocation3], %s18
      %s21 = sshll.u32 [#allocation2], 4
      %s22 = int_to_ptr.vmem [resolvable:$true] %s21
      %24 = dma.hbm_to_vmem [thread:$0]  %s0, 128, %s22, [#allocation3]
    $region5: #{tpu_custom_call.1} parent=1 // pred_fallthru
      _
    // Predicated region
    $region6: #{tpu_custom_call.1} parent=1 // pred_check
      _
    $region7: #{tpu_custom_call.1} parent=1 // pred_check_branch
      %26 = sbr.rel (0) target = $region9
    $region8: #{tpu_custom_call.1} parent=1 // pred_region
      %s28 = ssub.s32 512, 512
      %29 = vsyncadd [#allocation5], %s28
      %s30 = sshll.u32 [#allocation4], 4
      %s31 = int_to_ptr.vmem [resolvable:$true] %s30
      %36 = dma.hbm_to_vmem [thread:$0]  %s1, 512, %s31, [#allocation5], 128, 128, 8
    $region9: #{tpu_custom_call.1} parent=1 // pred_fallthru
      _
    // Predicated region
    $region10: #{tpu_custom_call.1} parent=1 // pred_check
      _
    $region11: #{tpu_custom_call.1} parent=1 // pred_check_branch
      %38 = sbr.rel (0) target = $region13
    $region12: #{tpu_custom_call.1} parent=1 // pred_region
      _
    $region13: #{tpu_custom_call.1} parent=1 // pred_fallthru
      _
    // Predicated region
    $region14: #{tpu_custom_call.1} parent=1 // pred_check
      _
    $region15: #{tpu_custom_call.1} parent=1 // pred_check_branch
      %40 = sbr.rel (0) target = $region17
    $region16: #{tpu_custom_call.1} parent=1 // pred_region
      %s42 = ssub.s32 2048, 2048
      %43 = vsyncadd [#allocation5], %s42
      %s44 = sshll.u32 [#allocation6], 4
      %s45 = int_to_ptr.vmem [resolvable:$true] %s44
      %50 = dma.hbm_to_vmem [thread:$0]  %s3, 2048, %s45, [#allocation5], 128, 128, 8
    $region17: #{tpu_custom_call.1} parent=1 // pred_fallthru
      _
    // Predicated region
    $region18: #{tpu_custom_call.1} parent=1 // pred_check
      _
    $region19: #{tpu_custom_call.1} parent=1 // pred_check_branch
      %52 = sbr.rel (0) target = $region21
    $region20: #{tpu_custom_call.1} parent=1 // pred_region
      _
    $region21: #{tpu_custom_call.1} parent=1 // pred_fallthru
      _
    // Predicated region
    $region22: #{tpu_custom_call.1} parent=1 // pred_check
      _
    $region23: #{tpu_custom_call.1} parent=1 // pred_check_branch
      %54 = sbr.rel (0) target = $region25
    $region24: #{tpu_custom_call.1} parent=1 // pred_region
      %s56 = ssub.s32 2048, 2048
      %57 = vsyncadd [#allocation8], %s56
      %s58 = sshll.u32 [#allocation7], 4
      %s59 = int_to_ptr.vmem [resolvable:$true] %s58
      %64 = dma.hbm_to_vmem [thread:$0]  %s5, 2048, %s59, [#allocation8], 128, 128, 8
    $region25: #{tpu_custom_call.1} parent=1 // pred_fallthru
      _
    // Predicated region
    $region26: #{tpu_custom_call.1} parent=1 // pred_check
      _
    $region27: #{tpu_custom_call.1} parent=1 // pred_check_branch
      %66 = sbr.rel (0) target = $region29
    $region28: #{tpu_custom_call.1} parent=1 // pred_region
      _
    $region29: #{tpu_custom_call.1} parent=1 // pred_fallthru
      _
    // Predicated region
    $region30: #{tpu_custom_call.1} parent=1 // pred_check
      _
    $region31: #{tpu_custom_call.1} parent=1 // pred_check_branch
      %68 = sbr.rel (0) target = $region33
    $region32: #{tpu_custom_call.1} parent=1 // pred_region
      %69 = dma.done [#allocation3], 128
    $region33: #{tpu_custom_call.1} parent=1 // pred_fallthru
      _
    // Predicated region
    $region34: #{tpu_custom_call.1} parent=1 // pred_check
      _
    $region35: #{tpu_custom_call.1} parent=1 // pred_check_branch
      %71 = sbr.rel (0) target = $region37
    $region36: #{tpu_custom_call.1} parent=1 // pred_region
      %72 = dma.done [#allocation5], 512
    $region37: #{tpu_custom_call.1} parent=1 // pred_fallthru
      _
    // Predicated region
    $region38: #{tpu_custom_call.1} parent=1 // pred_check
      _
    $region39: #{tpu_custom_call.1} parent=1 // pred_check_branch
      %74 = sbr.rel (0) target = $region41
    $region40: #{tpu_custom_call.1} parent=1 // pred_region
      %75 = dma.done [#allocation5], 2048
    $region41: #{tpu_custom_call.1} parent=1 // pred_fallthru
      _
    // Predicated region
    $region42: #{tpu_custom_call.1} parent=1 // pred_check
      _
    $region43: #{tpu_custom_call.1} parent=1 // pred_check_branch
      %77 = sbr.rel (0) target = $region45
    $region44: #{tpu_custom_call.1} parent=1 // pred_region
      %78 = dma.done [#allocation8], 2048
    $region45: #{tpu_custom_call.1} parent=1 // pred_fallthru
      _
    %v79 = vld [vmem:[#allocation4] sm:$0xff]
    %v80 = vld [vmem:[#allocation4 + $0x8] sm:$0xff]
    %v81 = vld [vmem:[#allocation4 + $0x10] sm:$0xff]
    %v82 = vld [vmem:[#allocation4 + $0x18] sm:$0xff]
    %v83 = vld [vmem:[%s2] sm:$0x1]
    %v84 = vld [vmem:[#allocation6] sm:$0xff]
    %v85 = vld [vmem:[#allocation6 + $0x8] sm:$0xff]
    %v86 = vld [vmem:[#allocation6 + $0x10] sm:$0xff]
    %v87 = vld [vmem:[#allocation6 + $0x18] sm:$0xff]
    %v88 = vld [vmem:[#allocation6 + $0x20] sm:$0xff]
    %v89 = vld [vmem:[#allocation6 + $0x28] sm:$0xff]
    %v90 = vld [vmem:[#allocation6 + $0x30] sm:$0xff]
    %v91 = vld [vmem:[#allocation6 + $0x38] sm:$0xff]
    %v92 = vld [vmem:[#allocation6 + $0x40] sm:$0xff]
    %v93 = vld [vmem:[#allocation6 + $0x48] sm:$0xff]
    %v94 = vld [vmem:[#allocation6 + $0x50] sm:$0xff]
    %v95 = vld [vmem:[#allocation6 + $0x58] sm:$0xff]
    %v96 = vld [vmem:[#allocation6 + $0x60] sm:$0xff]
    %v97 = vld [vmem:[#allocation6 + $0x68] sm:$0xff]
    %v98 = vld [vmem:[#allocation6 + $0x70] sm:$0xff]
    %v99 = vld [vmem:[#allocation6 + $0x78] sm:$0xff]
    %v100 = vld [vmem:[%s4] sm:$0x1]
    %v101 = vld [vmem:[#allocation7] sm:$0xff]
    %v102 = vld [vmem:[#allocation7 + $0x8] sm:$0xff]
    %v103 = vld [vmem:[#allocation7 + $0x10] sm:$0xff]
    %v104 = vld [vmem:[#allocation7 + $0x18] sm:$0xff]
    %v105 = vld [vmem:[#allocation7 + $0x20] sm:$0xff]
    %v106 = vld [vmem:[#allocation7 + $0x28] sm:$0xff]
    %v107 = vld [vmem:[#allocation7 + $0x30] sm:$0xff]
    %v108 = vld [vmem:[#allocation7 + $0x38] sm:$0xff]
    %v109 = vld [vmem:[#allocation7 + $0x40] sm:$0xff]
    %v110 = vld [vmem:[#allocation7 + $0x48] sm:$0xff]
    %v111 = vld [vmem:[#allocation7 + $0x50] sm:$0xff]
    %v112 = vld [vmem:[#allocation7 + $0x58] sm:$0xff]
    %v113 = vld [vmem:[#allocation7 + $0x60] sm:$0xff]
    %v114 = vld [vmem:[#allocation7 + $0x68] sm:$0xff]
    %v115 = vld [vmem:[#allocation7 + $0x70] sm:$0xff]
    %v116 = vld [vmem:[#allocation7 + $0x78] sm:$0xff]
    %v117 = vld [vmem:[%s6] sm:$0x1]
    %v118 = vld [vmem:[#allocation2] sm:$0xff]
    %v120 = vlaneseq
    %v121 = vshrl.u32 %v120, 7
    %v122 = vsub.s32 0, %v121
    %v123 = vrot.slane %v83, %v122
    %vm125 = vcmask 261120
    %v127 = vsel %vm125, %v118, 0
    %129 = vmatprep.subr.mxu0 0.0
    %130 = vmatpush1.msra.mxu0 0.0
    %131 = vmatprep.subr.mxu0 0.0
    %132 = vmatpush1.msra.mxu0 0.0
    %133 = vmatprep.subr.mxu0 0.0
    %134 = vmatpush1.msra.mxu0 0.0
    %135 = vmatprep.subr.mxu0 0.0
    %136 = vmatpush1.msra.mxu0 0.0
    %137 = vmatprep.subr.mxu0 0.0
    %138 = vmatpush1.msra.mxu0 0.0
    %139 = vmatprep.subr.mxu0 0.0
    %140 = vmatpush1.msra.mxu0 0.0
    %141 = vmatprep.subr.mxu0 0.0
    %142 = vmatpush1.msra.mxu0 0.0
    %143 = vmatprep.subr.mxu0 0.0
    %144 = vmatpush1.msra.mxu0 0.0
    %145 = vmatprep.subr.mxu0 0.0
    %146 = vmatpush1.msra.mxu0 0.0
    %147 = vmatprep.subr.mxu0 0.0
    %148 = vmatpush1.msra.mxu0 0.0
    %149 = vmatprep.subr.mxu0 0.0
    %150 = vmatpush1.msra.mxu0 0.0
    %151 = vmatprep.subr.mxu0 0.0
    %152 = vmatpush1.msra.mxu0 0.0
    %153 = vmatprep.subr.mxu0 0.0
    %154 = vmatpush1.msra.mxu0 %v82
    %155 = vmatprep.subr.mxu0 0.0
    %156 = vmatpush1.msra.mxu0 %v81
    %157 = vmatprep.subr.mxu0 0.0
    %158 = vmatpush1.msra.mxu0 %v80
    %159 = vmatprep.subr.mxu0 0.0
    %160 = vmatpush1.msra.mxu0 %v79
    %161 = vmatprep.subr.mxu0 0.0
    %162 = vmatpush2.msra.mxu0 0.0
    %163 = vmatprep.subr.mxu0 0.0
    %164 = vmatpush2.msra.mxu0 0.0
    %165 = vmatprep.subr.mxu0 0.0
    %166 = vmatpush2.msra.mxu0 0.0
    %167 = vmatprep.subr.mxu0 0.0
    %168 = vmatpush2.msra.mxu0 0.0
    %169 = vmatprep.subr.mxu0 0.0
    %170 = vmatpush2.msra.mxu0 0.0
    %171 = vmatprep.subr.mxu0 0.0
    %172 = vmatpush2.msra.mxu0 0.0
    %173 = vmatprep.subr.mxu0 0.0
    %174 = vmatpush2.msra.mxu0 0.0
    %175 = vmatprep.subr.mxu0 0.0
    %176 = vmatpush2.msra.mxu0 0.0
    %177 = vmatprep.subr.mxu0 0.0
    %178 = vmatpush2.msra.mxu0 0.0
    %179 = vmatprep.subr.mxu0 0.0
    %180 = vmatpush2.msra.mxu0 0.0
    %181 = vmatprep.subr.mxu0 0.0
    %182 = vmatpush2.msra.mxu0 0.0
    %183 = vmatprep.subr.mxu0 0.0
    %184 = vmatpush2.msra.mxu0 0.0
    %185 = vmatprep.subr.mxu0 0.0
    %186 = vmatpush2.msra.mxu0 0.0
    %187 = vmatprep.subr.mxu0 0.0
    %188 = vmatpush2.msra.mxu0 0.0
    %189 = vmatprep.subr.mxu0 0.0
    %190 = vmatpush2.msra.mxu0 0.0
    %191 = vmatprep.subr.mxu0 0.0
    %192 = vmatpush2.msra.mxu0 0.0
    %193 = vmatprep.mubr.f32.mxu0 0.0
    %194 = vmatmul.mubr.f32.gmra.mxu0 %v127
    %v195 = vpop.f32.mrf.mxu0
    %v196 = vadd.f32 %v123, %v195
    %v197 = vpop.f32.mrf.mxu0
    %198 = vdwg.mxu0
    %v199 = vmax.f32 %v196, 0.0
    %v201 = vlaneseq
    %v202 = vshrl.u32 %v201, 7
    %v203 = vsub.s32 0, %v202
    %v204 = vrot.slane %v100, %v203
    %206 = vmatprep.subr.mxu0 0.0
    %207 = vmatpush1.msra.mxu0 %v99
    %208 = vmatprep.subr.mxu0 0.0
    %209 = vmatpush1.msra.mxu0 %v98
    %210 = vmatprep.subr.mxu0 0.0
    %211 = vmatpush1.msra.mxu0 %v97
    %212 = vmatprep.subr.mxu0 0.0
    %213 = vmatpush1.msra.mxu0 %v96
    %214 = vmatprep.subr.mxu0 0.0
    %215 = vmatpush1.msra.mxu0 %v95
    %216 = vmatprep.subr.mxu0 0.0
    %217 = vmatpush1.msra.mxu0 %v94
    %218 = vmatprep.subr.mxu0 0.0
    %219 = vmatpush1.msra.mxu0 %v93
    %220 = vmatprep.subr.mxu0 0.0
    %221 = vmatpush1.msra.mxu0 %v92
    %222 = vmatprep.subr.mxu0 0.0
    %223 = vmatpush1.msra.mxu0 %v91
    %224 = vmatprep.subr.mxu0 0.0
    %225 = vmatpush1.msra.mxu0 %v90
    %226 = vmatprep.subr.mxu0 0.0
    %227 = vmatpush1.msra.mxu0 %v89
    %228 = vmatprep.subr.mxu0 0.0
    %229 = vmatpush1.msra.mxu0 %v88
    %230 = vmatprep.subr.mxu0 0.0
    %231 = vmatpush1.msra.mxu0 %v87
    %232 = vmatprep.subr.mxu0 0.0
    %233 = vmatpush1.msra.mxu0 %v86
    %234 = vmatprep.subr.mxu0 0.0
    %235 = vmatpush1.msra.mxu0 %v85
    %236 = vmatprep.subr.mxu0 0.0
    %237 = vmatpush1.msra.mxu0 %v84
    %238 = vmatprep.subr.mxu0 0.0
    %239 = vmatpush2.msra.mxu0 0.0
    %240 = vmatprep.subr.mxu0 0.0
    %241 = vmatpush2.msra.mxu0 0.0
    %242 = vmatprep.subr.mxu0 0.0
    %243 = vmatpush2.msra.mxu0 0.0
    %244 = vmatprep.subr.mxu0 0.0
    %245 = vmatpush2.msra.mxu0 0.0
    %246 = vmatprep.subr.mxu0 0.0
    %247 = vmatpush2.msra.mxu0 0.0
    %248 = vmatprep.subr.mxu0 0.0
    %249 = vmatpush2.msra.mxu0 0.0
    %250 = vmatprep.subr.mxu0 0.0
    %251 = vmatpush2.msra.mxu0 0.0
    %252 = vmatprep.subr.mxu0 0.0
    %253 = vmatpush2.msra.mxu0 0.0
    %254 = vmatprep.subr.mxu0 0.0
    %255 = vmatpush2.msra.mxu0 0.0
    %256 = vmatprep.subr.mxu0 0.0
    %257 = vmatpush2.msra.mxu0 0.0
    %258 = vmatprep.subr.mxu0 0.0
    %259 = vmatpush2.msra.mxu0 0.0
    %260 = vmatprep.subr.mxu0 0.0
    %261 = vmatpush2.msra.mxu0 0.0
    %262 = vmatprep.subr.mxu0 0.0
    %263 = vmatpush2.msra.mxu0 0.0
    %264 = vmatprep.subr.mxu0 0.0
    %265 = vmatpush2.msra.mxu0 0.0
    %266 = vmatprep.subr.mxu0 0.0
    %267 = vmatpush2.msra.mxu0 0.0
    %268 = vmatprep.subr.mxu0 0.0
    %269 = vmatpush2.msra.mxu0 0.0
    %270 = vmatprep.mubr.f32.mxu0 0.0
    %271 = vmatmul.mubr.f32.gmra.mxu0 %v199
    %v272 = vpop.f32.mrf.mxu0
    %v273 = vadd.f32 %v204, %v272
    %v274 = vpop.f32.mrf.mxu0
    %275 = vdwg.mxu0
    %v276 = vmax.f32 %v273, 0.0
    %v278 = vlaneseq
    %v279 = vshrl.u32 %v278, 7
    %v280 = vsub.s32 0, %v279
    %v281 = vrot.slane %v117, %v280
    %283 = vmatprep.subr.mxu0 0.0
    %284 = vmatpush1.msra.mxu0 %v116
    %285 = vmatprep.subr.mxu0 0.0
    %286 = vmatpush1.msra.mxu0 %v115
    %287 = vmatprep.subr.mxu0 0.0
    %288 = vmatpush1.msra.mxu0 %v114
    %289 = vmatprep.subr.mxu0 0.0
    %290 = vmatpush1.msra.mxu0 %v113
    %291 = vmatprep.subr.mxu0 0.0
    %292 = vmatpush1.msra.mxu0 %v112
    %293 = vmatprep.subr.mxu0 0.0
    %294 = vmatpush1.msra.mxu0 %v111
    %295 = vmatprep.subr.mxu0 0.0
    %296 = vmatpush1.msra.mxu0 %v110
    %297 = vmatprep.subr.mxu0 0.0
    %298 = vmatpush1.msra.mxu0 %v109
    %299 = vmatprep.subr.mxu0 0.0
    %300 = vmatpush1.msra.mxu0 %v108
    %301 = vmatprep.subr.mxu0 0.0
    %302 = vmatpush1.msra.mxu0 %v107
    %303 = vmatprep.subr.mxu0 0.0
    %304 = vmatpush1.msra.mxu0 %v106
    %305 = vmatprep.subr.mxu0 0.0
    %306 = vmatpush1.msra.mxu0 %v105
    %307 = vmatprep.subr.mxu0 0.0
    %308 = vmatpush1.msra.mxu0 %v104
    %309 = vmatprep.subr.mxu0 0.0
    %310 = vmatpush1.msra.mxu0 %v103
    %311 = vmatprep.subr.mxu0 0.0
    %312 = vmatpush1.msra.mxu0 %v102
    %313 = vmatprep.subr.mxu0 0.0
    %314 = vmatpush1.msra.mxu0 %v101
    %315 = vmatprep.subr.mxu0 0.0
    %316 = vmatpush2.msra.mxu0 0.0
    %317 = vmatprep.subr.mxu0 0.0
    %318 = vmatpush2.msra.mxu0 0.0
    %319 = vmatprep.subr.mxu0 0.0
    %320 = vmatpush2.msra.mxu0 0.0
    %321 = vmatprep.subr.mxu0 0.0
    %322 = vmatpush2.msra.mxu0 0.0
    %323 = vmatprep.subr.mxu0 0.0
    %324 = vmatpush2.msra.mxu0 0.0
    %325 = vmatprep.subr.mxu0 0.0
    %326 = vmatpush2.msra.mxu0 0.0
    %327 = vmatprep.subr.mxu0 0.0
    %328 = vmatpush2.msra.mxu0 0.0
    %329 = vmatprep.subr.mxu0 0.0
    %330 = vmatpush2.msra.mxu0 0.0
    %331 = vmatprep.subr.mxu0 0.0
    %332 = vmatpush2.msra.mxu0 0.0
    %333 = vmatprep.subr.mxu0 0.0
    %334 = vmatpush2.msra.mxu0 0.0
    %335 = vmatprep.subr.mxu0 0.0
    %336 = vmatpush2.msra.mxu0 0.0
    %337 = vmatprep.subr.mxu0 0.0
    %338 = vmatpush2.msra.mxu0 0.0
    %339 = vmatprep.subr.mxu0 0.0
    %340 = vmatpush2.msra.mxu0 0.0
    %341 = vmatprep.subr.mxu0 0.0
    %342 = vmatpush2.msra.mxu0 0.0
    %343 = vmatprep.subr.mxu0 0.0
    %344 = vmatpush2.msra.mxu0 0.0
    %345 = vmatprep.subr.mxu0 0.0
    %346 = vmatpush2.msra.mxu0 0.0
    %347 = vmatprep.mubr.f32.mxu0 0.0
    %348 = vmatmul.mubr.f32.gmra.mxu0 %v276
    %v349 = vpop.f32.mrf.mxu0
    %v350 = vadd.f32 %v281, %v349
    %v351 = vpop.f32.mrf.mxu0
    %352 = vdwg.mxu0
    %vm353 = vcmask 15360
    %354 = vst.msk [vmem:[%s7] sm:$0xff] %vm353, %v350
    // Predicated region
    $region46: #{tpu_custom_call.1} parent=1 // pred_check
      _
    $region47: #{tpu_custom_call.1} parent=1 // pred_check_branch
      %356 = sbr.rel (0) target = $region49
    $region48: #{tpu_custom_call.1} parent=1 // pred_region
      _
    $region49: #{tpu_custom_call.1} parent=1 // pred_fallthru
      _
    // Predicated region
    $region50: #{tpu_custom_call.1} parent=1 // pred_check
      _
    $region51: #{tpu_custom_call.1} parent=1 // pred_check_branch
      %358 = sbr.rel (0) target = $region53
    $region52: #{tpu_custom_call.1} parent=1 // pred_region
      _
    $region53: #{tpu_custom_call.1} parent=1 // pred_fallthru
      _
    %359 = vsyncpa [#allocation3], 1
    %360 = vsyncpa [#allocation5], 1
    %361 = vsyncpa [#allocation8], 1

</llo_original>
